<compile_context>
chip_gen: v7x
topology: tpu7x:2x2x1
jax: 0.10.0
libtpu: 0.0.40
codegen_flags: <defaults>
</compile_context>

<pallas_src>
import functools
import math

import jax
import jax.numpy as jnp
from jax.experimental import pallas as pl
from jax.experimental.pallas import tpu as pltpu


def _round_up(a, b):
    return (a + b - 1) // b * b


def _cdiv(a, b):
    return (a + b - 1) // b


def _vmem_capacity_bytes():
    """Physical VMEM per core; falls back to 128 MiB if the query fails."""
    try:
        return int(pltpu.get_tpu_info().vmem_capacity_bytes)
    except Exception:
        return 128 << 20


def _ffn_kernel(x_ref, w1_ref, b1_ref, w2_ref, b2_ref, o_ref, acc_ref, *,
                approximate_gelu):
    j = pl.program_id(1)

    # First linear on this hidden tile: (TM, E) @ (E, TN) -> f32 (TM, TN).
    # x is already in the weight dtype (cast hoisted to the wrapper).
    h = jnp.dot(x_ref[...], w1_ref[...], preferred_element_type=jnp.float32)
    h = h + b1_ref[...].astype(jnp.float32)          # (1, TN) broadcast

    # GELU in f32.  Exact (erf) matches torch.nn.GELU(); tanh approximation
    # routes through the EUP (its own VLIW slot -> ~free next to the MXU) and
    # is preferred for perf when exact torch parity is not required.
    if approximate_gelu:
        c = jnp.float32(math.sqrt(2.0 / math.pi))
        h = 0.5 * h * (1.0 + jnp.tanh(c * (h + jnp.float32(0.044715) * h * h * h)))
    else:
        inv_sqrt2 = jnp.float32(1.0 / math.sqrt(2.0))
        h = 0.5 * h * (1.0 + jax.lax.erf(h * inv_sqrt2))

    # Second linear partial product: (TM, TN) @ (TN, E), accumulated in f32.
    partial = jnp.dot(h.astype(w2_ref.dtype), w2_ref[...],
                      preferred_element_type=jnp.float32)

    @pl.when(j == 0)
    def _first():
        acc_ref[...] = partial          # write directly; skip zero + add

    @pl.when(j > 0)
    def _accumulate():
        acc_ref[...] += partial

    @pl.when(j == pl.num_programs(1) - 1)
    def _finalize():
        o_ref[...] = (acc_ref[...] + b2_ref[...].astype(jnp.float32)
                      ).astype(o_ref.dtype)


@functools.partial(
    jax.jit,
    static_argnames=("block_m", "block_h", "approximate_gelu",
                     "weight_buffer_count"))
def feed_forward_network(x, w1, b1, w2, b2, *, block_m=None, block_h=512,
                         approximate_gelu=False, weight_buffer_count=2):
    """x: (..., E). w1: (E, H), b1: (H,), w2: (H, E), b2: (E,).

    Weights are stored [in_features, out_features] (pre-transposed vs
    PyTorch's [out, in]) so the kernel does plain row-major matmuls.
    """
    embed_dim = x.shape[-1]
    hidden_dim = w1.shape[-1]
    orig_shape = x.shape

    x2d = x.reshape(-1, embed_dim)                       # (M, E)
    m = x2d.shape[0]

    # ---- chip-aware budget ------------------------------------------------
    vmem_cap = _vmem_capacity_bytes()
    small_vmem = vmem_cap <= (96 << 20)          # proxy for v7x (64 MiB, 2 TC)
    # Leave compiler/internal-scratch headroom: ~56 MiB on v7x, ~112 MiB v5e/v6e.
    vmem_budget = vmem_cap - max(8 << 20, vmem_cap // 8)

    if block_m is None:
        # Weights are re-streamed once per token tile -> arithmetic intensity
        # ~ tm FLOPs/byte.  Bigger token tiles keep v6e/v7x MXU-bound.
        block_m = 448 if small_vmem else 768

    isw = jnp.dtype(w1.dtype).itemsize
    isx = isw                                    # x is cast to weight dtype
    iso = jnp.dtype(x.dtype).itemsize

    # ---- static tile / padding plan ----------------------------------------
    tm = _round_up(min(block_m, _round_up(m, 8)), 8)
    # v7x megacore: make sure the 'parallel' token axis has >= 2 programs so
    # both TensorCores get work (v5e/v6e have 1 TC -> keep the single tile).
    if small_vmem and _cdiv(m, tm) < 2 and m > 8:
        tm = _round_up(_cdiv(m, 2), 8)
    tn = _round_up(min(block_h, _round_up(hidden_dim, 128)), 128)
    e_pad = _round_up(embed_dim, 128)            # lane-dense output stores

    wbuf = max(2, int(weight_buffer_count))

    def footprint(tm_, tn_):
        return (2 * tm_ * e_pad * isx            # x tile (double-buffered)
                + wbuf * e_pad * tn_ * isw       # W1 hidden tile
                + 2 * tn_ * isw                  # b1 tile
                + wbuf * tn_ * e_pad * isw       # W2 hidden tile
                + 2 * e_pad * isw                # b2
                + 2 * tm_ * e_pad * iso          # out tile
                + tm_ * e_pad * 4)               # f32 accumulator scratch

    # Auto-shrink tiles (tn first, then tm) rather than silently clamping the
    # vmem limit below the real footprint.
    while footprint(tm, tn) > vmem_budget:
        if tn > 128:
            tn = max(128, _round_up(tn // 2, 128))
        elif tm > 8:
            tm = max(8, _round_up(tm // 2, 8))
        else:
            break
    if footprint(tm, tn) > vmem_budget:
        # TODO(synk): for very large embed dims on 64-MiB-VMEM chips, split the
        # output E dimension into chunks instead of failing here.
        raise ValueError(
            f"FFN tile footprint {footprint(tm, tn)} B exceeds VMEM budget "
            f"{vmem_budget} B even at minimum tile sizes (E={embed_dim}).")

    m_pad = _round_up(m, tm)
    h_pad = _round_up(hidden_dim, tn)

    # ---- zero-padding (padded rows/cols contribute 0 / are sliced off) -----
    x_p = jnp.pad(x2d.astype(w1.dtype),
                  ((0, m_pad - m), (0, e_pad - embed_dim)))
    w1_p = jnp.pad(w1, ((0, e_pad - embed_dim), (0, h_pad - hidden_dim)))
    b1_p = jnp.pad(b1, (0, h_pad - hidden_dim)).reshape(1, h_pad)
    w2_p = jnp.pad(w2, ((0, h_pad - hidden_dim), (0, e_pad - embed_dim)))
    b2_p = jnp.pad(b2, (0, e_pad - embed_dim)).reshape(1, e_pad)

    grid = (m_pad // tm, h_pad // tn)
    n_m_tiles = grid[0]

    vmem_limit = int(min(max(footprint(tm, tn) + (4 << 20), 16 << 20),
                         vmem_budget))

    cost = pl.CostEstimate(
        flops=4 * m_pad * e_pad * h_pad,                 # two matmuls
        transcendentals=m_pad * h_pad,                   # GELU
        bytes_accessed=(m_pad * e_pad * isx              # read x
                        + m_pad * e_pad * iso            # write out
                        + n_m_tiles * (2 * e_pad * h_pad * isw   # weights,
                                       + (h_pad + e_pad) * isw)  # re-streamed
                        ),
    )

    w_spec_kwargs = {}
    if wbuf > 2:
        # Extra weight buffering only for HBM-latency-bound configs with VMEM
        # headroom (weight tiles are the dominant per-step DMA).
        w_spec_kwargs = dict(pipeline_mode=pl.Buffered(wbuf))

    kernel = functools.partial(_ffn_kernel, approximate_gelu=approximate_gelu)

    out_p = pl.pallas_call(
        kernel,
        out_shape=jax.ShapeDtypeStruct((m_pad, e_pad), x.dtype),
        grid_spec=pltpu.PrefetchScalarGridSpec(
            num_scalar_prefetch=0,
            grid=grid,
            in_specs=[
                pl.BlockSpec((tm, e_pad), lambda i, j: (i, 0)),   # x tile
                pl.BlockSpec((e_pad, tn), lambda i, j: (0, j),    # W1 tile
                             **w_spec_kwargs),
                pl.BlockSpec((1, tn), lambda i, j: (0, j)),       # b1 tile
                pl.BlockSpec((tn, e_pad), lambda i, j: (j, 0),    # W2 tile
                             **w_spec_kwargs),
                pl.BlockSpec((1, e_pad), lambda i, j: (0, 0)),    # b2
            ],
            out_specs=pl.BlockSpec((tm, e_pad), lambda i, j: (i, 0)),
            scratch_shapes=[pltpu.VMEM((tm, e_pad), jnp.float32)],
        ),
        compiler_params=pltpu.CompilerParams(
            dimension_semantics=("parallel", "arbitrary"),
            vmem_limit_bytes=vmem_limit),
        cost_estimate=cost,
    )(x_p, w1_p, b1_p, w2_p, b2_p)

    return out_p[:m, :embed_dim].reshape(orig_shape)


def init_ffn_params(key, embed_dim, hidden_dim, dtype=jnp.float32):
    """Mirrors torch.nn.Linear's U(-1/sqrt(fan_in), 1/sqrt(fan_in)) init."""
    k1, k2, k3, k4 = jax.random.split(key, 4)
    lim1 = 1.0 / math.sqrt(embed_dim)
    lim2 = 1.0 / math.sqrt(hidden_dim)
    # Stored as [in_features, out_features] (pre-transposed vs PyTorch).
    w1 = jax.random.uniform(k1, (embed_dim, hidden_dim), dtype, -lim1, lim1)
    b1 = jax.random.uniform(k2, (hidden_dim,), dtype, -lim1, lim1)
    w2 = jax.random.uniform(k3, (hidden_dim, embed_dim), dtype, -lim2, lim2)
    b2 = jax.random.uniform(k4, (embed_dim,), dtype, -lim2, lim2)
    return w1, b1, w2, b2


def _reference_ffn(x, w1, b1, w2, b2):
    h = x @ w1 + b1
    h = jax.nn.gelu(h, approximate=False)
    return h @ w2 + b2


if __name__ == "__main__":
    key = jax.random.PRNGKey(0)
    kx1, kp1, kx2, kp2 = jax.random.split(key, 4)

    # --- small case: single tile in each grid axis ------------------------
    batch, seq, embed_dim, hidden_dim = 2, 8, 32, 64
    x = jax.random.normal(kx1, (batch, seq, embed_dim), jnp.float32)
    w1, b1, w2, b2 = init_ffn_params(kp1, embed_dim, hidden_dim)
    out = jax.block_until_ready(feed_forward_network(x, w1, b1, w2, b2))
    ref = _reference_ffn(x, w1, b1, w2, b2)
    assert out.shape == x.shape
    assert jnp.allclose(out, ref, atol=1e-5, rtol=1e-5), "mismatch (small case)"

    # --- multi-tile case: exercises token tiling + hidden accumulation ----
    batch, seq, embed_dim, hidden_dim = 2, 64, 32, 256
    x2 = jax.random.normal(kx2, (batch, seq, embed_dim), jnp.float32)
    w1b, b1b, w2b, b2b = init_ffn_params(kp2, embed_dim, hidden_dim)
    out2 = jax.block_until_ready(
        feed_forward_network(x2, w1b, b1b, w2b, b2b, block_m=64, block_h=128))
    ref2 = _reference_ffn(x2, w1b, b1b, w2b, b2b)
    assert out2.shape == x2.shape
    assert jnp.allclose(out2, ref2, atol=2e-5, rtol=1e-5), "mismatch (tiled case)"

    # --- auto-planned case (default chip-aware block_m) --------------------
    out3 = jax.block_until_ready(feed_forward_network(x2, w1b, b1b, w2b, b2b))
    assert jnp.allclose(out3, ref2, atol=2e-5, rtol=1e-5), "mismatch (auto case)"

    print("KERNEL_OK")
</pallas_src>

<mosaic_0001>
module attributes {stable_mosaic.version = 11 : i64} {
  func.func @_ffn_kernel(%arg0: i32, %arg1: i32, %arg2: memref<16x128xf32, #tpu.memory_space<vmem>>, %arg3: memref<128x128xf32, #tpu.memory_space<vmem>>, %arg4: memref<1x128xf32, #tpu.memory_space<vmem>>, %arg5: memref<128x128xf32, #tpu.memory_space<vmem>>, %arg6: memref<1x128xf32, #tpu.memory_space<vmem>>, %arg7: memref<16x128xf32, #tpu.memory_space<vmem>>, %arg8: memref<16x128xf32, #tpu.memory_space<vmem>>) attributes {dimension_semantics = [#tpu.dimension_semantics<parallel>, #tpu.dimension_semantics<arbitrary>], iteration_bounds = array<i64: 1, 1>, scalar_prefetch = 0 : i64, scratch_operands = 1 : i64, tpu.core_type = #tpu.core_type<tc>, window_params = [{transform_indices = @transform_0, window_bounds = array<i64: 16, 128>}, {transform_indices = @transform_1, window_bounds = array<i64: 128, 128>}, {transform_indices = @transform_2, window_bounds = array<i64: 1, 128>}, {transform_indices = @transform_3, window_bounds = array<i64: 128, 128>}, {pipeline_mode = #tpu.pipeline_mode<synchronous>, transform_indices = @transform_4, window_bounds = array<i64: 1, 128>}, {transform_indices = @transform_5, window_bounds = array<i64: 16, 128>}]} {
    %c0 = arith.constant 0 : index
    %c0_0 = arith.constant 0 : index
    %0 = vector.load %arg2[%c0, %c0_0] : memref<16x128xf32, #tpu.memory_space<vmem>>, vector<16x128xf32>
    %c0_1 = arith.constant 0 : index
    %c0_2 = arith.constant 0 : index
    %1 = vector.load %arg3[%c0_1, %c0_2] : memref<128x128xf32, #tpu.memory_space<vmem>>, vector<128x128xf32>
    %cst = arith.constant dense<0.000000e+00> : vector<16x128xf32>
    %2 = tpu.matmul %0, %1, %cst {dimension_numbers = #tpu.dot_dimension_numbers<[1], [0], [0], [1], [0, 0, 1, 1], [], []>} : vector<16x128xf32>, vector<128x128xf32>, vector<16x128xf32> -> vector<16x128xf32>
    %c0_3 = arith.constant 0 : index
    %c0_4 = arith.constant 0 : index
    %3 = vector.load %arg4[%c0_3, %c0_4] : memref<1x128xf32, #tpu.memory_space<vmem>>, vector<1x128xf32>
    %4 = vector.broadcast %3 : vector<1x128xf32> to vector<16x128xf32>
    %5 = arith.addf %2, %4 : vector<16x128xf32>
    %cst_5 = arith.constant 5.000000e-01 : f32
    %6 = vector.broadcast %cst_5 : f32 to vector<16x128xf32>
    %7 = arith.mulf %6, %5 : vector<16x128xf32>
    %cst_6 = arith.constant 0.707106769 : f32
    %8 = vector.broadcast %cst_6 : f32 to vector<16x128xf32>
    %9 = arith.mulf %5, %8 : vector<16x128xf32>
    %10 = math.erf %9 : vector<16x128xf32>
    %cst_7 = arith.constant 1.000000e+00 : f32
    %11 = vector.broadcast %cst_7 : f32 to vector<16x128xf32>
    %12 = arith.addf %11, %10 : vector<16x128xf32>
    %13 = arith.mulf %7, %12 : vector<16x128xf32>
    %c0_8 = arith.constant 0 : index
    %c0_9 = arith.constant 0 : index
    %14 = vector.load %arg5[%c0_8, %c0_9] : memref<128x128xf32, #tpu.memory_space<vmem>>, vector<128x128xf32>
    %cst_10 = arith.constant dense<0.000000e+00> : vector<16x128xf32>
    %15 = tpu.matmul %13, %14, %cst_10 {dimension_numbers = #tpu.dot_dimension_numbers<[1], [0], [0], [1], [0, 0, 1, 1], [], []>} : vector<16x128xf32>, vector<128x128xf32>, vector<16x128xf32> -> vector<16x128xf32>
    %c0_i32 = arith.constant 0 : i32
    %16 = arith.cmpi eq, %arg1, %c0_i32 : i32
    %17 = arith.extui %16 : i1 to i32
    %c0_i32_11 = arith.constant 0 : i32
    %18 = arith.cmpi ne, %17, %c0_i32_11 : i32
    scf.if %18 {
      %c0_16 = arith.constant 0 : index
      %c0_17 = arith.constant 0 : index
      %25 = vector.load %arg8[%c0_16, %c0_17] : memref<16x128xf32, #tpu.memory_space<vmem>>, vector<16x128xf32>
      tpu.vector_store %arg8[%c0_16, %c0_17], %15 {strides = array<i32>} : memref<16x128xf32, #tpu.memory_space<vmem>>, vector<16x128xf32>,
    } else {
    }
    %c0_i32_12 = arith.constant 0 : i32
    %19 = arith.cmpi sgt, %arg1, %c0_i32_12 : i32
    %20 = arith.extui %19 : i1 to i32
    %c0_i32_13 = arith.constant 0 : i32
    %21 = arith.cmpi ne, %20, %c0_i32_13 : i32
    scf.if %21 {
      %c0_16 = arith.constant 0 : index
      %c0_17 = arith.constant 0 : index
      %25 = vector.load %arg8[%c0_16, %c0_17] : memref<16x128xf32, #tpu.memory_space<vmem>>, vector<16x128xf32>
      %26 = arith.addf %25, %15 : vector<16x128xf32>
      %c0_18 = arith.constant 0 : index
      %c0_19 = arith.constant 0 : index
      %27 = vector.load %arg8[%c0_18, %c0_19] : memref<16x128xf32, #tpu.memory_space<vmem>>, vector<16x128xf32>
      tpu.vector_store %arg8[%c0_18, %c0_19], %26 {strides = array<i32>} : memref<16x128xf32, #tpu.memory_space<vmem>>, vector<16x128xf32>,
    } else {
    }
    %c0_i32_14 = arith.constant 0 : i32
    %22 = arith.cmpi eq, %arg1, %c0_i32_14 : i32
    %23 = arith.extui %22 : i1 to i32
    %c0_i32_15 = arith.constant 0 : i32
    %24 = arith.cmpi ne, %23, %c0_i32_15 : i32
    scf.if %24 {
      %c0_16 = arith.constant 0 : index
      %c0_17 = arith.constant 0 : index
      %25 = vector.load %arg8[%c0_16, %c0_17] : memref<16x128xf32, #tpu.memory_space<vmem>>, vector<16x128xf32>
      %c0_18 = arith.constant 0 : index
      %c0_19 = arith.constant 0 : index
      %26 = vector.load %arg6[%c0_18, %c0_19] : memref<1x128xf32, #tpu.memory_space<vmem>>, vector<1x128xf32>
      %27 = vector.broadcast %26 : vector<1x128xf32> to vector<16x128xf32>
      %28 = arith.addf %25, %27 : vector<16x128xf32>
      %c0_20 = arith.constant 0 : index
      %c0_21 = arith.constant 0 : index
      %29 = vector.load %arg7[%c0_20, %c0_21] : memref<16x128xf32, #tpu.memory_space<vmem>>, vector<16x128xf32>
      tpu.vector_store %arg7[%c0_20, %c0_21], %28 {strides = array<i32>} : memref<16x128xf32, #tpu.memory_space<vmem>>, vector<16x128xf32>,
    } else {
    }
    return
  }
  func.func @transform_0(%arg0: i32, %arg1: i32) -> (i32, i32) {
    %c0_i32 = arith.constant 0 : i32
    %c0_i32_0 = arith.constant 0 : i32
    return %arg0, %c0_i32 : i32, i32
  }
  func.func @transform_1(%arg0: i32, %arg1: i32) -> (i32, i32) {
    %c0_i32 = arith.constant 0 : i32
    %c0_i32_0 = arith.constant 0 : i32
    return %c0_i32, %arg1 : i32, i32
  }
  func.func @transform_2(%arg0: i32, %arg1: i32) -> (i32, i32) {
    %c0_i32 = arith.constant 0 : i32
    %c0_i32_0 = arith.constant 0 : i32
    return %c0_i32, %arg1 : i32, i32
  }
  func.func @transform_3(%arg0: i32, %arg1: i32) -> (i32, i32) {
    %c0_i32 = arith.constant 0 : i32
    %c0_i32_0 = arith.constant 0 : i32
    return %arg1, %c0_i32 : i32, i32
  }
  func.func @transform_4(%arg0: i32, %arg1: i32) -> (i32, i32) {
    %c0_i32 = arith.constant 0 : i32
    %c0_i32_0 = arith.constant 0 : i32
    %c0_i32_1 = arith.constant 0 : i32
    return %c0_i32, %c0_i32_0 : i32, i32
  }
  func.func @transform_5(%arg0: i32, %arg1: i32) -> (i32, i32) {
    %c0_i32 = arith.constant 0 : i32
    %c0_i32_0 = arith.constant 0 : i32
    return %arg0, %c0_i32 : i32, i32
  }
}

</mosaic_0001>

<llo_original>
// kernel: feed_forward_network.1
$region0: #{feed_forward_network.1}
  #allocation0 [shape = 'u32[]', space=smem, size = 0x4, offset = 0x4, fixed_abs, tag = 'smem constant byte address 0x4 - core index']
  #allocation1 [shape = 'u32[144,128]{1,0:T(1,128)}', space=vmem, size = 0x12000, scoped, tag = 'internal scratch']
  #allocation2 [shape = 'f32[16,128]{1,0:T(8,128)}', space=vmem, size = 0x2000, scoped, tag = 'scratch operand']
  %s0 = inlined_call_operand.vmem [shape: f32[16,128], index: 0, kind: input, shape index: {}]
  %s1 = inlined_call_operand.vmem [shape: f32[128,128], index: 1, kind: input, shape index: {}]
  %s2 = inlined_call_operand.vmem [shape: f32[1,128], index: 2, kind: input, shape index: {}]
  %s3 = inlined_call_operand.vmem [shape: f32[128,128], index: 3, kind: input, shape index: {}]
  %s4 = inlined_call_operand.vmem [shape: f32[1,128], index: 4, kind: input, shape index: {}]
  %s5 = inlined_call_operand.vmem [shape: f32[16,128], index: 5, kind: output, shape index: {}]
  %s6 = sld [smem:[#allocation0]]
  $region42: #{feed_forward_network.1} parent=0
    _
  %s8 = ssub.s32 1, %s6
  %s9 = scalar_select 0, %s8, %s6
  // Predicated region
  $region2: #{feed_forward_network.1} parent=0 // pred_check
    _
  $region3: #{feed_forward_network.1} parent=0 // pred_check_branch
    %11 = sbr.rel (0) target = $region5
  $region4: #{feed_forward_network.1} parent=0 // pred_region
    _
  $region5: #{feed_forward_network.1} parent=0 // pred_fallthru
    _
  // Predicated region
  $region6: #{feed_forward_network.1} parent=0 // pred_check
    _
  $region7: #{feed_forward_network.1} parent=0 // pred_check_branch
    %13 = sbr.rel (0) target = $region9
  $region8: #{feed_forward_network.1} parent=0 // pred_region
    _
  $region9: #{feed_forward_network.1} parent=0 // pred_fallthru
    _
  // Predicated region
  $region10: #{feed_forward_network.1} parent=0 // pred_check
    _
  $region11: #{feed_forward_network.1} parent=0 // pred_check_branch
    %15 = sbr.rel (0) target = $region13
  $region12: #{feed_forward_network.1} parent=0 // pred_region
    _
  $region13: #{feed_forward_network.1} parent=0 // pred_fallthru
    _
  // Predicated region
  $region14: #{feed_forward_network.1} parent=0 // pred_check
    _
  $region15: #{feed_forward_network.1} parent=0 // pred_check_branch
    %17 = sbr.rel (0) target = $region17
  $region16: #{feed_forward_network.1} parent=0 // pred_region
    _
  $region17: #{feed_forward_network.1} parent=0 // pred_fallthru
    _
  // Predicated region
  $region18: #{feed_forward_network.1} parent=0 // pred_check
    _
  $region19: #{feed_forward_network.1} parent=0 // pred_check_branch
    %19 = sbr.rel (0) target = $region21
  $region20: #{feed_forward_network.1} parent=0 // pred_region
    _
  $region21: #{feed_forward_network.1} parent=0 // pred_fallthru
    _
  %v20 = vld [vmem:[%s0] sm:$0xff]
  %v21 = vld [vmem:[%s0 + $0x8] sm:$0xff]
  %v22 = vld [vmem:[%s1] sm:$0xff]
  %v23 = vld [vmem:[%s1 + $0x8] sm:$0xff]
  %v24 = vld [vmem:[%s1 + $0x10] sm:$0xff]
  %v25 = vld [vmem:[%s1 + $0x18] sm:$0xff]
  %v26 = vld [vmem:[%s1 + $0x20] sm:$0xff]
  %v27 = vld [vmem:[%s1 + $0x28] sm:$0xff]
  %v28 = vld [vmem:[%s1 + $0x30] sm:$0xff]
  %v29 = vld [vmem:[%s1 + $0x38] sm:$0xff]
  %v30 = vld [vmem:[%s1 + $0x40] sm:$0xff]
  %v31 = vld [vmem:[%s1 + $0x48] sm:$0xff]
  %v32 = vld [vmem:[%s1 + $0x50] sm:$0xff]
  %v33 = vld [vmem:[%s1 + $0x58] sm:$0xff]
  %v34 = vld [vmem:[%s1 + $0x60] sm:$0xff]
  %v35 = vld [vmem:[%s1 + $0x68] sm:$0xff]
  %v36 = vld [vmem:[%s1 + $0x70] sm:$0xff]
  %v37 = vld [vmem:[%s1 + $0x78] sm:$0xff]
  %v38 = vld [vmem:[%s2] sm:$0x1]
  %v40 = vlaneseq
  %v41 = vshrl.u32 %v40, 7
  %v42 = vsub.s32 0, %v41
  %v43 = vrot.slane %v38, %v42
  %45 = vmatprep.subr.mxu0 0.0
  %46 = vmatpush1.msra.mxu0 %v22
  %47 = vmatprep.subr.mxu0 0.0
  %48 = vmatpush1.msra.mxu0 %v23
  %49 = vmatprep.subr.mxu0 0.0
  %50 = vmatpush1.msra.mxu0 %v24
  %51 = vmatprep.subr.mxu0 0.0
  %52 = vmatpush1.msra.mxu0 %v25
  %53 = vmatprep.subr.mxu0 0.0
  %54 = vmatpush1.msra.mxu0 %v26
  %55 = vmatprep.subr.mxu0 0.0
  %56 = vmatpush1.msra.mxu0 %v27
  %57 = vmatprep.subr.mxu0 0.0
  %58 = vmatpush1.msra.mxu0 %v28
  %59 = vmatprep.subr.mxu0 0.0
  %60 = vmatpush1.msra.mxu0 %v29
  %61 = vmatprep.subr.mxu0 0.0
  %62 = vmatpush1.msra.mxu0 %v30
  %63 = vmatprep.subr.mxu0 0.0
  %64 = vmatpush1.msra.mxu0 %v31
  %65 = vmatprep.subr.mxu0 0.0
  %66 = vmatpush1.msra.mxu0 %v32
  %67 = vmatprep.subr.mxu0 0.0
  %68 = vmatpush1.msra.mxu0 %v33
  %69 = vmatprep.subr.mxu0 0.0
  %70 = vmatpush1.msra.mxu0 %v34
  %71 = vmatprep.subr.mxu0 0.0
  %72 = vmatpush1.msra.mxu0 %v35
  %73 = vmatprep.subr.mxu0 0.0
  %74 = vmatpush1.msra.mxu0 %v36
  %75 = vmatprep.subr.mxu0 0.0
  %76 = vmatpush1.msra.mxu0 %v37
  %77 = vmatprep.subr.mxu0 0.0
  %78 = vmatpush1.msra.mxu0 0.0
  %79 = vmatprep.subr.mxu0 0.0
  %80 = vmatpush1.msra.mxu0 0.0
  %81 = vmatprep.subr.mxu0 0.0
  %82 = vmatpush1.msra.mxu0 0.0
  %83 = vmatprep.subr.mxu0 0.0
  %84 = vmatpush1.msra.mxu0 0.0
  %85 = vmatprep.subr.mxu0 0.0
  %86 = vmatpush1.msra.mxu0 0.0
  %87 = vmatprep.subr.mxu0 0.0
  %88 = vmatpush1.msra.mxu0 0.0
  %89 = vmatprep.subr.mxu0 0.0
  %90 = vmatpush1.msra.mxu0 0.0
  %91 = vmatprep.subr.mxu0 0.0
  %92 = vmatpush1.msra.mxu0 0.0
  %93 = vmatprep.subr.mxu0 0.0
  %94 = vmatpush1.msra.mxu0 0.0
  %95 = vmatprep.subr.mxu0 0.0
  %96 = vmatpush1.msra.mxu0 0.0
  %97 = vmatprep.subr.mxu0 0.0
  %98 = vmatpush1.msra.mxu0 0.0
  %99 = vmatprep.subr.mxu0 0.0
  %100 = vmatpush1.msra.mxu0 0.0
  %101 = vmatprep.subr.mxu0 0.0
  %102 = vmatpush1.msra.mxu0 0.0
  %103 = vmatprep.subr.mxu0 0.0
  %104 = vmatpush1.msra.mxu0 0.0
  %105 = vmatprep.subr.mxu0 0.0
  %106 = vmatpush1.msra.mxu0 0.0
  %107 = vmatprep.subr.mxu0 0.0
  %108 = vmatpush1.msra.mxu0 0.0
  %109 = vmatprep.mubr.f32.mxu0 0.0
  %110 = vmatmul.mubr.f32.gmra.mrb[0].mxu0 %v20
  %v111 = vpop.f32.mrb[0].mxu0
  %v112 = vadd.f32 %v43, %v111
  %v113 = vpop.f32.mrb[0].mxu0
  %114 = vmatprep.mubr.f32.mxu0 0.0
  %115 = vmatmul.mubr.f32.gmra.mrb[0].mxu0 %v21
  %v116 = vpop.f32.mrb[0].mxu0
  %v117 = vadd.f32 %v43, %v116
  %v118 = vpop.f32.mrb[0].mxu0
  %119 = vdwg.mxu0
  %v120 = vmul.f32 %v112, 0.5
  %v121 = vmul.f32 %v117, 0.5
  %v122 = vmul.f32 %v112, 0.70710677
  %v123 = vmul.f32 %v117, 0.70710677
  %v124 = verf.f32.pop %v122
  %v125 = verf.f32.pop %v123
  %v126 = vadd.f32 %v124, 1.0
  %v127 = vadd.f32 %v125, 1.0
  %v128 = vmul.f32 %v120, %v126
  %v129 = vmul.f32 %v121, %v127
  %v130 = vld [vmem:[%s3] sm:$0xff]
  %v131 = vld [vmem:[%s3 + $0x8] sm:$0xff]
  %v132 = vld [vmem:[%s3 + $0x10] sm:$0xff]
  %v133 = vld [vmem:[%s3 + $0x18] sm:$0xff]
  %v134 = vld [vmem:[%s3 + $0x20] sm:$0xff]
  %v135 = vld [vmem:[%s3 + $0x28] sm:$0xff]
  %v136 = vld [vmem:[%s3 + $0x30] sm:$0xff]
  %v137 = vld [vmem:[%s3 + $0x38] sm:$0xff]
  %v138 = vld [vmem:[%s3 + $0x40] sm:$0xff]
  %v139 = vld [vmem:[%s3 + $0x48] sm:$0xff]
  %v140 = vld [vmem:[%s3 + $0x50] sm:$0xff]
  %v141 = vld [vmem:[%s3 + $0x58] sm:$0xff]
  %v142 = vld [vmem:[%s3 + $0x60] sm:$0xff]
  %v143 = vld [vmem:[%s3 + $0x68] sm:$0xff]
  %v144 = vld [vmem:[%s3 + $0x70] sm:$0xff]
  %v145 = vld [vmem:[%s3 + $0x78] sm:$0xff]
  %146 = vmatprep.subr.mxu0 0.0
  %147 = vmatpush1.msra.mxu0 %v130
  %148 = vmatprep.subr.mxu0 0.0
  %149 = vmatpush1.msra.mxu0 %v131
  %150 = vmatprep.subr.mxu0 0.0
  %151 = vmatpush1.msra.mxu0 %v132
  %152 = vmatprep.subr.mxu0 0.0
  %153 = vmatpush1.msra.mxu0 %v133
  %154 = vmatprep.subr.mxu0 0.0
  %155 = vmatpush1.msra.mxu0 %v134
  %156 = vmatprep.subr.mxu0 0.0
  %157 = vmatpush1.msra.mxu0 %v135
  %158 = vmatprep.subr.mxu0 0.0
  %159 = vmatpush1.msra.mxu0 %v136
  %160 = vmatprep.subr.mxu0 0.0
  %161 = vmatpush1.msra.mxu0 %v137
  %162 = vmatprep.subr.mxu0 0.0
  %163 = vmatpush1.msra.mxu0 %v138
  %164 = vmatprep.subr.mxu0 0.0
  %165 = vmatpush1.msra.mxu0 %v139
  %166 = vmatprep.subr.mxu0 0.0
  %167 = vmatpush1.msra.mxu0 %v140
  %168 = vmatprep.subr.mxu0 0.0
  %169 = vmatpush1.msra.mxu0 %v141
  %170 = vmatprep.subr.mxu0 0.0
  %171 = vmatpush1.msra.mxu0 %v142
  %172 = vmatprep.subr.mxu0 0.0
  %173 = vmatpush1.msra.mxu0 %v143
  %174 = vmatprep.subr.mxu0 0.0
  %175 = vmatpush1.msra.mxu0 %v144
  %176 = vmatprep.subr.mxu0 0.0
  %177 = vmatpush1.msra.mxu0 %v145
  %178 = vmatprep.subr.mxu0 0.0
  %179 = vmatpush1.msra.mxu0 0.0
  %180 = vmatprep.subr.mxu0 0.0
  %181 = vmatpush1.msra.mxu0 0.0
  %182 = vmatprep.subr.mxu0 0.0
  %183 = vmatpush1.msra.mxu0 0.0
  %184 = vmatprep.subr.mxu0 0.0
  %185 = vmatpush1.msra.mxu0 0.0
  %186 = vmatprep.subr.mxu0 0.0
  %187 = vmatpush1.msra.mxu0 0.0
  %188 = vmatprep.subr.mxu0 0.0
  %189 = vmatpush1.msra.mxu0 0.0
  %190 = vmatprep.subr.mxu0 0.0
  %191 = vmatpush1.msra.mxu0 0.0
  %192 = vmatprep.subr.mxu0 0.0
  %193 = vmatpush1.msra.mxu0 0.0
  %194 = vmatprep.subr.mxu0 0.0
  %195 = vmatpush1.msra.mxu0 0.0
  %196 = vmatprep.subr.mxu0 0.0
  %197 = vmatpush1.msra.mxu0 0.0
  %198 = vmatprep.subr.mxu0 0.0
  %199 = vmatpush1.msra.mxu0 0.0
  %200 = vmatprep.subr.mxu0 0.0
  %201 = vmatpush1.msra.mxu0 0.0
  %202 = vmatprep.subr.mxu0 0.0
  %203 = vmatpush1.msra.mxu0 0.0
  %204 = vmatprep.subr.mxu0 0.0
  %205 = vmatpush1.msra.mxu0 0.0
  %206 = vmatprep.subr.mxu0 0.0
  %207 = vmatpush1.msra.mxu0 0.0
  %208 = vmatprep.subr.mxu0 0.0
  %209 = vmatpush1.msra.mxu0 0.0
  %210 = vmatprep.mubr.f32.mxu0 0.0
  %211 = vmatmul.mubr.f32.gmra.mrb[0].mxu0 %v128
  %v212 = vpop.f32.mrb[0].mxu0
  %v213 = vadd.f32 0.0, %v212
  %v214 = vpop.f32.mrb[0].mxu0
  %215 = vmatprep.mubr.f32.mxu0 0.0
  %216 = vmatmul.mubr.f32.gmra.mrb[0].mxu0 %v129
  %v217 = vpop.f32.mrb[0].mxu0
  %v218 = vadd.f32 0.0, %v217
  %v219 = vpop.f32.mrb[0].mxu0
  %220 = vdwg.mxu0
  %p221 = scmp.eq.s32.totalorder 0, 0
  // Predicated region
  $region22: #{feed_forward_network.1} parent=0 // pred_check
    %p222 = pneg %p221
  $region23: #{feed_forward_network.1} parent=0 // pred_check_branch
    %224 = sbr.rel (%p222) target = $region25
  $region24: #{feed_forward_network.1} parent=0 // pred_region
    %225 = vst [vmem:[#allocation2] sm:$0xff] %v213
    %226 = vst [vmem:[#allocation2 + $0x8] sm:$0xff] %v218
  $region25: #{feed_forward_network.1} parent=0 // pred_fallthru
    _
  %p227 = scmp.gt.s32.totalorder 0, 0
  // Predicated region
  $region26: #{feed_forward_network.1} parent=0 // pred_check
    %p228 = pneg %p227
  $region27: #{feed_forward_network.1} parent=0 // pred_check_branch
    %230 = sbr.rel (%p228) target = $region29
  $region28: #{feed_forward_network.1} parent=0 // pred_region
    %v231 = vld [vmem:[#allocation2] sm:$0xff]
    %v232 = vld [vmem:[#allocation2 + $0x8] sm:$0xff]
    %v233 = vadd.f32 %v231, %v213
    %v234 = vadd.f32 %v232, %v218
    %235 = vst [vmem:[#allocation2] sm:$0xff] %v233
    %236 = vst [vmem:[#allocation2 + $0x8] sm:$0xff] %v234
  $region29: #{feed_forward_network.1} parent=0 // pred_fallthru
    _
  // Predicated region
  $region30: #{feed_forward_network.1} parent=0 // pred_check
    %p237 = pneg %p221
  $region31: #{feed_forward_network.1} parent=0 // pred_check_branch
    %239 = sbr.rel (%p237) target = $region33
  $region32: #{feed_forward_network.1} parent=0 // pred_region
    %v240 = vld [vmem:[#allocation2] sm:$0xff]
    %v241 = vld [vmem:[#allocation2 + $0x8] sm:$0xff]
    %v242 = vld [vmem:[%s4] sm:$0x1]
    %v244 = vlaneseq
    %v245 = vshrl.u32 %v244, 7
    %v246 = vsub.s32 0, %v245
    %v247 = vrot.slane %v242, %v246
    %v249 = vadd.f32 %v240, %v247
    %v250 = vadd.f32 %v241, %v247
    %251 = vst [vmem:[%s5] sm:$0xff] %v249
    %252 = vst [vmem:[%s5 + $0x8] sm:$0xff] %v250
  $region33: #{feed_forward_network.1} parent=0 // pred_fallthru
    _
  // Predicated region
  $region34: #{feed_forward_network.1} parent=0 // pred_check
    _
  $region35: #{feed_forward_network.1} parent=0 // pred_check_branch
    %254 = sbr.rel (0) target = $region37
  $region36: #{feed_forward_network.1} parent=0 // pred_region
    _
  $region37: #{feed_forward_network.1} parent=0 // pred_fallthru
    _
  // Predicated region
  $region38: #{feed_forward_network.1} parent=0 // pred_check
    _
  $region39: #{feed_forward_network.1} parent=0 // pred_check_branch
    %256 = sbr.rel (0) target = $region41
  $region40: #{feed_forward_network.1} parent=0 // pred_region
    _
  $region41: #{feed_forward_network.1} parent=0 // pred_fallthru
    _

</llo_original>
